<compile_context>
chip_gen: v5e
topology: v5e:2x2
jax: 0.10.0
libtpu: 0.0.40
codegen_flags: <defaults>
</compile_context>

<pallas_src>
import jax
import jax.numpy as jnp
from jax.experimental import pallas as pl
from jax.experimental.pallas import tpu as pltpu

_MIB = 1024 * 1024


def _round_up(a, b):
    return (a + b - 1) // b * b


def _gelu_exact(x):
    # nn.GELU() default is the exact erf formulation (kept for bit-faithfulness;
    # a tanh-approx GELU would be cheaper on v5e's VALU but deviates slightly).
    return 0.5 * x * (1.0 + jax.lax.erf(x * 0.7071067811865476))


def _tpu_generation_config():
    """Per-generation tile targets + VMEM budget."""
    kind = ""
    try:
        kind = jax.devices()[0].device_kind.lower()
    except Exception:
        pass
    if "v7" in kind:
        return dict(tm=512, th=512, tn=1024, vmem_budget=48 * _MIB, two_tc=True)
    if "v6" in kind:
        return dict(tm=1024, th=1024, tn=2048, vmem_budget=96 * _MIB, two_tc=False)
    if "v5" in kind:
        return dict(tm=256, th=1024, tn=2048, vmem_budget=96 * _MIB, two_tc=False)
    # Unknown generation: conservative (assume 64 MiB-class VMEM).
    return dict(tm=256, th=512, tn=1024, vmem_budget=48 * _MIB, two_tc=False)


def _choose_chunk(total128, target):
    """Chunk size (multiple of 128, <= target) minimizing padding waste of
    `total128` (already a multiple of 128); prefer the largest such chunk."""
    target = max(128, min(_round_up(target, 128), total128))
    best, best_waste = 128, None
    for c in range(128, target + 1, 128):
        waste = _round_up(total128, c) - total128
        if best_waste is None or waste < best_waste or (waste == best_waste and c > best):
            best, best_waste = c, waste
    return best


def _vmem_estimate(tm, th, tn, k_pad, cbytes, obytes):
    """Double-buffered pipelined blocks + accumulator + in-kernel temporaries."""
    x_b = tm * k_pad * cbytes * 2
    w1_b = k_pad * th * cbytes * 2
    b1_b = th * 4 * 2
    w2_b = th * tn * cbytes * 2
    b2_b = tn * 4 * 2
    o_b = tm * tn * obytes * 2
    acc = tm * tn * 4
    tmp = tm * th * (4 + cbytes)  # f32 GELU block + compute-dtype copy for fc2
    return x_b + w1_b + b1_b + w2_b + b2_b + o_b + acc + tmp


def mlp_kernel(x_ref, w1_ref, b1_ref, w2_ref, b2_ref, o_ref, acc_ref):
    # Grid: (i, n, h) — token tile, output-feature tile, hidden-chunk reduction
    # (innermost).  acc_ref: (tm, tn) f32 accumulator over the h chunks.
    h_idx = pl.program_id(2)

    # fc1 (f32 accumulation) + bias + exact GELU on this hidden chunk.
    h = jnp.dot(x_ref[...], w1_ref[...], preferred_element_type=jnp.float32)
    h = _gelu_exact(h + b1_ref[...])
    # dropout p=0.0 -> identity.
    partial = jnp.dot(h.astype(w2_ref.dtype), w2_ref[...],
                      preferred_element_type=jnp.float32)

    # First h chunk WRITES (no zero-init + RMW pass).
    @pl.when(h_idx == 0)
    def _():
        acc_ref[...] = partial

    @pl.when(h_idx != 0)
    def _():
        acc_ref[...] += partial

    @pl.when(h_idx == pl.num_programs(2) - 1)
    def _():
        o_ref[...] = (acc_ref[...] + b2_ref[...]).astype(o_ref.dtype)


def mlp_pallas(x, w1, b1, w2, b2, *, tm=None, th=None, tn=None,
               compute_dtype=jnp.bfloat16):
    """x: (B, N, in_feat). Weights stored transposed vs. PyTorch:
       w1: (in_feat, h_feat), w2: (h_feat, out_feat). Biases: (h_feat,), (out_feat,).
       compute_dtype: MXU operand dtype (bf16 by default); accumulation is f32."""
    B, N, in_feat = x.shape
    h_feat = w1.shape[1]
    out_feat = w2.shape[1]
    out_dtype = x.dtype
    if compute_dtype is None:
        compute_dtype = x.dtype

    cfg = _tpu_generation_config()
    tm = cfg["tm"] if tm is None else tm
    th = cfg["th"] if th is None else th
    tn = cfg["tn"] if tn is None else tn

    M = B * N

    # Lane-dense feature dims (multiples of 128): full vregs, unmasked stores.
    K_pad = _round_up(in_feat, 128)
    H128 = _round_up(h_feat, 128)
    N128 = _round_up(out_feat, 128)

    # Hidden / output chunk sizes chosen to minimize dead (zero) padding work.
    th = _choose_chunk(H128, th)
    tn = _choose_chunk(N128, tn)

    # Token tile: clamp to the problem; on 2-TC chips (v7x) keep >= 2 M tiles
    # so the "parallel" M axis actually splits across TensorCores.
    tm = min(tm, _round_up(M, 8))
    if cfg["two_tc"] and M > 8:
        tm = min(tm, _round_up(-(-M // 2), 8))

    # Shrink tiles (tm -> th -> tn) until the working set fits the budget,
    # leaving headroom for compiler-internal scratch.
    cbytes = jnp.dtype(compute_dtype).itemsize
    obytes = jnp.dtype(out_dtype).itemsize
    budget = cfg["vmem_budget"] - 2 * _MIB
    while _vmem_estimate(tm, th, tn, K_pad, cbytes, obytes) > budget:
        if tm > 128:
            tm = max(128, _round_up(tm // 2, 8))
        elif th > 128:
            th = max(128, _round_up(th // 2, 128))
        elif tn > 128:
            tn = max(128, _round_up(tn // 2, 128))
        else:
            break

    M_pad = _round_up(M, tm)
    H_pad = _round_up(H128, th)
    N_pad = _round_up(N128, tn)

    def _prep2d(a, rows, cols):
        pr, pc = rows - a.shape[0], cols - a.shape[1]
        if pr or pc:
            a = jnp.pad(a, ((0, pr), (0, pc)))
        return a if a.dtype == compute_dtype else a.astype(compute_dtype)

    def _prep_bias(b, cols):
        pc = cols - b.shape[0]
        if pc:
            b = jnp.pad(b, (0, pc))
        b = b.reshape(1, cols)
        return b if b.dtype == jnp.float32 else b.astype(jnp.float32)

    x2d = x.reshape(M, in_feat)
    xp = _prep2d(x2d, M_pad, K_pad)
    # NOTE: for repeated calls (e.g. inside a model), pre-pad/pre-cast the
    # weights & biases once at parameter-load time instead of per call.
    w1p = _prep2d(w1, K_pad, H_pad)
    w2p = _prep2d(w2, H_pad, N_pad)
    b1p = _prep_bias(b1, H_pad)
    b2p = _prep_bias(b2, N_pad)

    grid = (M_pad // tm, N_pad // tn, H_pad // th)

    out2d = pl.pallas_call(
        mlp_kernel,
        out_shape=jax.ShapeDtypeStruct((M_pad, N_pad), out_dtype),
        grid_spec=pltpu.PrefetchScalarGridSpec(
            num_scalar_prefetch=0,
            grid=grid,
            in_specs=[
                pl.BlockSpec((tm, K_pad), lambda i, n, h: (i, 0)),  # x: resident over n, h
                pl.BlockSpec((K_pad, th), lambda i, n, h: (0, h)),  # w1: streamed over h
                pl.BlockSpec((1, th), lambda i, n, h: (0, h)),
                pl.BlockSpec((th, tn), lambda i, n, h: (h, n)),     # w2: streamed over h
                pl.BlockSpec((1, tn), lambda i, n, h: (0, n)),
            ],
            out_specs=pl.BlockSpec((tm, tn), lambda i, n, h: (i, n)),
            scratch_shapes=[pltpu.VMEM((tm, tn), jnp.float32)],
        ),
        compiler_params=pltpu.CompilerParams(
            dimension_semantics=("parallel", "parallel", "arbitrary"),
            vmem_limit_bytes=cfg["vmem_budget"],
        ),
    )(xp, w1p, b1p, w2p, b2p)

    if M_pad != M or N_pad != out_feat:
        out2d = out2d[:M, :out_feat]
    return out2d.reshape(B, N, out_feat)


def mlp_reference(x, w1, b1, w2, b2):
    h = jnp.dot(x, w1) + b1
    h = _gelu_exact(h)
    return jnp.dot(h, w2) + b2


if __name__ == "__main__":
    # Small shapes consistent with the module: in_feat=32, h_feat=64, out_feat=32
    B, N, in_feat, h_feat, out_feat = 2, 8, 32, 64, 32

    key = jax.random.PRNGKey(0)
    kx, k1, k2, k3, k4 = jax.random.split(key, 5)
    x = jax.random.normal(kx, (B, N, in_feat), dtype=jnp.float32)

    # Deterministic parameter init (PyTorch-Linear-like uniform bound).
    bound1 = 1.0 / jnp.sqrt(in_feat)
    bound2 = 1.0 / jnp.sqrt(h_feat)
    w1 = jax.random.uniform(k1, (in_feat, h_feat), jnp.float32, -bound1, bound1)
    b1 = jax.random.uniform(k2, (h_feat,), jnp.float32, -bound1, bound1)
    w2 = jax.random.uniform(k3, (h_feat, out_feat), jnp.float32, -bound2, bound2)
    b2 = jax.random.uniform(k4, (out_feat,), jnp.float32, -bound2, bound2)

    ref = mlp_reference(x, w1, b1, w2, b2)

    # (1) f32 operand path: exact vs reference (validates kernel semantics + padding).
    out_f32 = mlp_pallas(x, w1, b1, w2, b2, compute_dtype=jnp.float32)
    out_f32 = jax.block_until_ready(out_f32)
    assert out_f32.shape == (B, N, out_feat)
    assert jnp.allclose(out_f32, ref, atol=1e-5, rtol=1e-5)

    # (2) default bf16 operand path (MXU-peak dtype, f32 accumulation): relaxed tol.
    out_bf16 = mlp_pallas(x, w1, b1, w2, b2)
    out_bf16 = jax.block_until_ready(out_bf16)
    assert out_bf16.shape == (B, N, out_feat)
    assert jnp.allclose(out_bf16, ref, atol=5e-2, rtol=5e-2)

    print("KERNEL_OK")
</pallas_src>

<mosaic_0001>
module attributes {stable_mosaic.version = 11 : i64} {
  func.func @mlp_kernel(%arg0: i32, %arg1: i32, %arg2: i32, %arg3: memref<16x128xf32, #tpu.memory_space<vmem>>, %arg4: memref<128x128xf32, #tpu.memory_space<vmem>>, %arg5: memref<1x128xf32, #tpu.memory_space<vmem>>, %arg6: memref<128x128xf32, #tpu.memory_space<vmem>>, %arg7: memref<1x128xf32, #tpu.memory_space<vmem>>, %arg8: memref<16x128xf32, #tpu.memory_space<vmem>>, %arg9: memref<16x128xf32, #tpu.memory_space<vmem>>) attributes {dimension_semantics = [#tpu.dimension_semantics<parallel>, #tpu.dimension_semantics<parallel>, #tpu.dimension_semantics<arbitrary>], iteration_bounds = array<i64: 1, 1, 1>, scalar_prefetch = 0 : i64, scratch_operands = 1 : i64, tpu.core_type = #tpu.core_type<tc>, window_params = [{transform_indices = @transform_0, window_bounds = array<i64: 16, 128>}, {transform_indices = @transform_1, window_bounds = array<i64: 128, 128>}, {transform_indices = @transform_2, window_bounds = array<i64: 1, 128>}, {transform_indices = @transform_3, window_bounds = array<i64: 128, 128>}, {transform_indices = @transform_4, window_bounds = array<i64: 1, 128>}, {transform_indices = @transform_5, window_bounds = array<i64: 16, 128>}]} {
    %c0 = arith.constant 0 : index
    %c0_0 = arith.constant 0 : index
    %0 = vector.load %arg3[%c0, %c0_0] : memref<16x128xf32, #tpu.memory_space<vmem>>, vector<16x128xf32>
    %c0_1 = arith.constant 0 : index
    %c0_2 = arith.constant 0 : index
    %1 = vector.load %arg4[%c0_1, %c0_2] : memref<128x128xf32, #tpu.memory_space<vmem>>, vector<128x128xf32>
    %cst = arith.constant dense<0.000000e+00> : vector<16x128xf32>
    %2 = tpu.matmul %0, %1, %cst {dimension_numbers = #tpu.dot_dimension_numbers<[1], [0], [0], [1], [0, 0, 1, 1], [], []>} : vector<16x128xf32>, vector<128x128xf32>, vector<16x128xf32> -> vector<16x128xf32>
    %c0_3 = arith.constant 0 : index
    %c0_4 = arith.constant 0 : index
    %3 = vector.load %arg5[%c0_3, %c0_4] : memref<1x128xf32, #tpu.memory_space<vmem>>, vector<1x128xf32>
    %4 = vector.broadcast %3 : vector<1x128xf32> to vector<16x128xf32>
    %5 = arith.addf %2, %4 : vector<16x128xf32>
    %cst_5 = arith.constant 5.000000e-01 : f32
    %6 = vector.broadcast %cst_5 : f32 to vector<16x128xf32>
    %7 = arith.mulf %6, %5 : vector<16x128xf32>
    %cst_6 = arith.constant 0.707106769 : f32
    %8 = vector.broadcast %cst_6 : f32 to vector<16x128xf32>
    %9 = arith.mulf %5, %8 : vector<16x128xf32>
    %10 = math.erf %9 : vector<16x128xf32>
    %cst_7 = arith.constant 1.000000e+00 : f32
    %11 = vector.broadcast %cst_7 : f32 to vector<16x128xf32>
    %12 = arith.addf %11, %10 : vector<16x128xf32>
    %13 = arith.mulf %7, %12 : vector<16x128xf32>
    %c0_8 = arith.constant 0 : index
    %c0_9 = arith.constant 0 : index
    %14 = vector.load %arg6[%c0_8, %c0_9] : memref<128x128xf32, #tpu.memory_space<vmem>>, vector<128x128xf32>
    %cst_10 = arith.constant dense<0.000000e+00> : vector<16x128xf32>
    %15 = tpu.matmul %13, %14, %cst_10 {dimension_numbers = #tpu.dot_dimension_numbers<[1], [0], [0], [1], [0, 0, 1, 1], [], []>} : vector<16x128xf32>, vector<128x128xf32>, vector<16x128xf32> -> vector<16x128xf32>
    %c0_i32 = arith.constant 0 : i32
    %16 = arith.cmpi eq, %arg2, %c0_i32 : i32
    %17 = arith.extui %16 : i1 to i32
    %c0_i32_11 = arith.constant 0 : i32
    %18 = arith.cmpi ne, %17, %c0_i32_11 : i32
    scf.if %18 {
      %c0_16 = arith.constant 0 : index
      %c0_17 = arith.constant 0 : index
      %25 = vector.load %arg9[%c0_16, %c0_17] : memref<16x128xf32, #tpu.memory_space<vmem>>, vector<16x128xf32>
      tpu.vector_store %arg9[%c0_16, %c0_17], %15 {strides = array<i32>} : memref<16x128xf32, #tpu.memory_space<vmem>>, vector<16x128xf32>,
    } else {
    }
    %c0_i32_12 = arith.constant 0 : i32
    %19 = arith.cmpi ne, %arg2, %c0_i32_12 : i32
    %20 = arith.extui %19 : i1 to i32
    %c0_i32_13 = arith.constant 0 : i32
    %21 = arith.cmpi ne, %20, %c0_i32_13 : i32
    scf.if %21 {
      %c0_16 = arith.constant 0 : index
      %c0_17 = arith.constant 0 : index
      %25 = vector.load %arg9[%c0_16, %c0_17] : memref<16x128xf32, #tpu.memory_space<vmem>>, vector<16x128xf32>
      %26 = arith.addf %25, %15 : vector<16x128xf32>
      %c0_18 = arith.constant 0 : index
      %c0_19 = arith.constant 0 : index
      %27 = vector.load %arg9[%c0_18, %c0_19] : memref<16x128xf32, #tpu.memory_space<vmem>>, vector<16x128xf32>
      tpu.vector_store %arg9[%c0_18, %c0_19], %26 {strides = array<i32>} : memref<16x128xf32, #tpu.memory_space<vmem>>, vector<16x128xf32>,
    } else {
    }
    %c0_i32_14 = arith.constant 0 : i32
    %22 = arith.cmpi eq, %arg2, %c0_i32_14 : i32
    %23 = arith.extui %22 : i1 to i32
    %c0_i32_15 = arith.constant 0 : i32
    %24 = arith.cmpi ne, %23, %c0_i32_15 : i32
    scf.if %24 {
      %c0_16 = arith.constant 0 : index
      %c0_17 = arith.constant 0 : index
      %25 = vector.load %arg9[%c0_16, %c0_17] : memref<16x128xf32, #tpu.memory_space<vmem>>, vector<16x128xf32>
      %c0_18 = arith.constant 0 : index
      %c0_19 = arith.constant 0 : index
      %26 = vector.load %arg7[%c0_18, %c0_19] : memref<1x128xf32, #tpu.memory_space<vmem>>, vector<1x128xf32>
      %27 = vector.broadcast %26 : vector<1x128xf32> to vector<16x128xf32>
      %28 = arith.addf %25, %27 : vector<16x128xf32>
      %c0_20 = arith.constant 0 : index
      %c0_21 = arith.constant 0 : index
      %29 = vector.load %arg8[%c0_20, %c0_21] : memref<16x128xf32, #tpu.memory_space<vmem>>, vector<16x128xf32>
      tpu.vector_store %arg8[%c0_20, %c0_21], %28 {strides = array<i32>} : memref<16x128xf32, #tpu.memory_space<vmem>>, vector<16x128xf32>,
    } else {
    }
    return
  }
  func.func @transform_0(%arg0: i32, %arg1: i32, %arg2: i32) -> (i32, i32) {
    %c0_i32 = arith.constant 0 : i32
    %c0_i32_0 = arith.constant 0 : i32
    return %arg0, %c0_i32 : i32, i32
  }
  func.func @transform_1(%arg0: i32, %arg1: i32, %arg2: i32) -> (i32, i32) {
    %c0_i32 = arith.constant 0 : i32
    %c0_i32_0 = arith.constant 0 : i32
    return %c0_i32, %arg2 : i32, i32
  }
  func.func @transform_2(%arg0: i32, %arg1: i32, %arg2: i32) -> (i32, i32) {
    %c0_i32 = arith.constant 0 : i32
    %c0_i32_0 = arith.constant 0 : i32
    return %c0_i32, %arg2 : i32, i32
  }
  func.func @transform_3(%arg0: i32, %arg1: i32, %arg2: i32) -> (i32, i32) {
    %c0_i32 = arith.constant 0 : i32
    return %arg2, %arg1 : i32, i32
  }
  func.func @transform_4(%arg0: i32, %arg1: i32, %arg2: i32) -> (i32, i32) {
    %c0_i32 = arith.constant 0 : i32
    %c0_i32_0 = arith.constant 0 : i32
    return %c0_i32, %arg1 : i32, i32
  }
  func.func @transform_5(%arg0: i32, %arg1: i32, %arg2: i32) -> (i32, i32) {
    %c0_i32 = arith.constant 0 : i32
    return %arg0, %arg1 : i32, i32
  }
}

</mosaic_0001>

<llo_original>
// kernel: tpu_custom_call.1
$region0: #{tpu_custom_call.1}
  #allocation0 [shape = 'u32[]', space=smem, size = 0x4, offset = 0x4, fixed_abs, tag = 'smem constant byte address 0x4 - core index']
  #allocation1 [shape = 'u32[72,128]{1,0:T(1,128)}', space=vmem, size = 0x9000, scoped, tag = 'internal scratch']
  #allocation2 [shape = 'f32[16,128]{1,0:T(8,128)}', space=vmem, size = 0x2000, scoped, tag = 'scratch operand']
  %s0 = inlined_call_operand.hbm [shape: f32[16,128], index: 0, kind: input, shape index: {}]
  %s1 = inlined_call_operand.hbm [shape: f32[128,128], index: 1, kind: input, shape index: {}]
  %s2 = inlined_call_operand.vmem [shape: f32[1,128], index: 2, kind: input, shape index: {}]
  %s3 = inlined_call_operand.hbm [shape: f32[128,128], index: 3, kind: input, shape index: {}]
  %s4 = inlined_call_operand.vmem [shape: f32[1,128], index: 4, kind: input, shape index: {}]
  %s5 = inlined_call_operand.hbm [shape: f32[16,128], index: 5, kind: output, shape index: {}]
  %s6 = sld [smem:[#allocation0]]
  $region54: #{tpu_custom_call.1} parent=0
    _
  %s8 = ssub.s32 1, %s6
  %s9 = scalar_select 0, %s8, %s6
  $region1: #{tpu_custom_call.1} parent=0
    #allocation3 [shape = 'u8[8192]{0}', space=vmem, size = 0x2000, scoped, tag = 'input window, operand 0, single buffered']
    #allocation4 [shape = 's32[1]{0}', space=sflag, size = 0x4, scoped, tag = 'scoped memory for tpu_custom_call.1']
    #allocation5 [shape = 's32[1]{0}', space=sflag, size = 0x4, scoped, tag = 'scoped memory for tpu_custom_call.1']
    #allocation6 [shape = 'u8[65536]{0}', space=vmem, size = 0x10000, scoped, tag = 'input window, operand 1, single buffered']
    #allocation7 [shape = 's32[1]{0}', space=sflag, size = 0x4, scoped, tag = 'scoped memory for tpu_custom_call.1']
    #allocation8 [shape = 'u8[65536]{0}', space=vmem, size = 0x10000, scoped, tag = 'input window, operand 3, single buffered']
    #allocation9 [shape = 'u8[8192]{0}', space=vmem, size = 0x2000, scoped, tag = 'output window, operand 0, single buffered']
    %10 = vsyncpa [#allocation4], 0
    %11 = vsyncpa [#allocation7], 0
    %12 = vsyncpa [#allocation5], 0
    // Predicated region
    $region2: #{tpu_custom_call.1} parent=1 // pred_check
      _
    $region3: #{tpu_custom_call.1} parent=1 // pred_check_branch
      %14 = sbr.rel (0) target = $region5
    $region4: #{tpu_custom_call.1} parent=1 // pred_region
      %16 = vsyncadd [#allocation4], 0
      %s17 = sshll.u32 %s0, 4
      %s18 = int_to_ptr.hbm [resolvable:$true] %s17
      %s19 = sshll.u32 [#allocation3], 4
      %s20 = int_to_ptr.vmem [resolvable:$true] %s19
      %25 = dma.hbm_to_vmem [thread:$0]  %s18, 256, %s20, [#allocation4], 128, 128, 8
    $region5: #{tpu_custom_call.1} parent=1 // pred_fallthru
      _
    // Predicated region
    $region6: #{tpu_custom_call.1} parent=1 // pred_check
      _
    $region7: #{tpu_custom_call.1} parent=1 // pred_check_branch
      %27 = sbr.rel (0) target = $region9
    $region8: #{tpu_custom_call.1} parent=1 // pred_region
      %29 = vsyncadd [#allocation7], 0
      %s30 = sshll.u32 %s1, 4
      %s31 = int_to_ptr.hbm [resolvable:$true] %s30
      %s32 = sshll.u32 [#allocation6], 4
      %s33 = int_to_ptr.vmem [resolvable:$true] %s32
      %38 = dma.hbm_to_vmem [thread:$0]  %s31, 2048, %s33, [#allocation7], 128, 128, 8
    $region9: #{tpu_custom_call.1} parent=1 // pred_fallthru
      _
    // Predicated region
    $region10: #{tpu_custom_call.1} parent=1 // pred_check
      _
    $region11: #{tpu_custom_call.1} parent=1 // pred_check_branch
      %40 = sbr.rel (0) target = $region13
    $region12: #{tpu_custom_call.1} parent=1 // pred_region
      _
    $region13: #{tpu_custom_call.1} parent=1 // pred_fallthru
      _
    // Predicated region
    $region14: #{tpu_custom_call.1} parent=1 // pred_check
      _
    $region15: #{tpu_custom_call.1} parent=1 // pred_check_branch
      %42 = sbr.rel (0) target = $region17
    $region16: #{tpu_custom_call.1} parent=1 // pred_region
      %44 = vsyncadd [#allocation7], 0
      %s45 = sshll.u32 %s3, 4
      %s46 = int_to_ptr.hbm [resolvable:$true] %s45
      %s47 = sshll.u32 [#allocation8], 4
      %s48 = int_to_ptr.vmem [resolvable:$true] %s47
      %53 = dma.hbm_to_vmem [thread:$0]  %s46, 2048, %s48, [#allocation7], 128, 128, 8
    $region17: #{tpu_custom_call.1} parent=1 // pred_fallthru
      _
    // Predicated region
    $region18: #{tpu_custom_call.1} parent=1 // pred_check
      _
    $region19: #{tpu_custom_call.1} parent=1 // pred_check_branch
      %55 = sbr.rel (0) target = $region21
    $region20: #{tpu_custom_call.1} parent=1 // pred_region
      _
    $region21: #{tpu_custom_call.1} parent=1 // pred_fallthru
      _
    // Predicated region
    $region22: #{tpu_custom_call.1} parent=1 // pred_check
      _
    $region23: #{tpu_custom_call.1} parent=1 // pred_check_branch
      %57 = sbr.rel (0) target = $region25
    $region24: #{tpu_custom_call.1} parent=1 // pred_region
      %59 = dma.done [#allocation4], 256
    $region25: #{tpu_custom_call.1} parent=1 // pred_fallthru
      _
    // Predicated region
    $region26: #{tpu_custom_call.1} parent=1 // pred_check
      _
    $region27: #{tpu_custom_call.1} parent=1 // pred_check_branch
      %61 = sbr.rel (0) target = $region29
    $region28: #{tpu_custom_call.1} parent=1 // pred_region
      %63 = dma.done [#allocation7], 2048
    $region29: #{tpu_custom_call.1} parent=1 // pred_fallthru
      _
    // Predicated region
    $region30: #{tpu_custom_call.1} parent=1 // pred_check
      _
    $region31: #{tpu_custom_call.1} parent=1 // pred_check_branch
      %65 = sbr.rel (0) target = $region33
    $region32: #{tpu_custom_call.1} parent=1 // pred_region
      %67 = dma.done [#allocation7], 2048
    $region33: #{tpu_custom_call.1} parent=1 // pred_fallthru
      _
    %v68 = vld [vmem:[#allocation3] sm:$0xff]
    %v69 = vld [vmem:[#allocation3 + $0x8] sm:$0xff]
    %v70 = vld [vmem:[#allocation6] sm:$0xff]
    %v71 = vld [vmem:[#allocation6 + $0x8] sm:$0xff]
    %v72 = vld [vmem:[#allocation6 + $0x10] sm:$0xff]
    %v73 = vld [vmem:[#allocation6 + $0x18] sm:$0xff]
    %v74 = vld [vmem:[#allocation6 + $0x20] sm:$0xff]
    %v75 = vld [vmem:[#allocation6 + $0x28] sm:$0xff]
    %v76 = vld [vmem:[#allocation6 + $0x30] sm:$0xff]
    %v77 = vld [vmem:[#allocation6 + $0x38] sm:$0xff]
    %v78 = vld [vmem:[#allocation6 + $0x40] sm:$0xff]
    %v79 = vld [vmem:[#allocation6 + $0x48] sm:$0xff]
    %v80 = vld [vmem:[#allocation6 + $0x50] sm:$0xff]
    %v81 = vld [vmem:[#allocation6 + $0x58] sm:$0xff]
    %v82 = vld [vmem:[#allocation6 + $0x60] sm:$0xff]
    %v83 = vld [vmem:[#allocation6 + $0x68] sm:$0xff]
    %v84 = vld [vmem:[#allocation6 + $0x70] sm:$0xff]
    %v85 = vld [vmem:[#allocation6 + $0x78] sm:$0xff]
    %v86 = vld [vmem:[%s2] sm:$0x1]
    %v88 = vperm.slane %v86, 0
    %90 = vmatpush.msra.mxu0 %v85
    %91 = vmatpush.msra.mxu0 %v84
    %92 = vmatpush.msra.mxu0 %v83
    %93 = vmatpush.msra.mxu0 %v82
    %94 = vmatpush.msra.mxu0 %v81
    %95 = vmatpush.msra.mxu0 %v80
    %96 = vmatpush.msra.mxu0 %v79
    %97 = vmatpush.msra.mxu0 %v78
    %98 = vmatpush.msra.mxu0 %v77
    %99 = vmatpush.msra.mxu0 %v76
    %100 = vmatpush.msra.mxu0 %v75
    %101 = vmatpush.msra.mxu0 %v74
    %102 = vmatpush.msra.mxu0 %v73
    %103 = vmatpush.msra.mxu0 %v72
    %104 = vmatpush.msra.mxu0 %v71
    %105 = vmatpush.msra.mxu0 %v70
    %106 = vmatmul.f32.gmra.mxu0 %v68
    %v107 = vpop.f32.mrf.mxu0
    %v108 = vadd.f32 %v88, %v107
    %109 = vmatmul.f32.gmra.mxu0 %v69
    %v110 = vpop.f32.mrf.mxu0
    %v111 = vadd.f32 %v88, %v110
    %112 = vdwg.mxu0
    %v113 = vmul.f32 %v108, 0.5
    %v114 = vmul.f32 %v111, 0.5
    %v115 = vmul.f32 %v108, 0.70710677
    %v116 = vmul.f32 %v111, 0.70710677
    %v117 = vmul.f32 %v115, %v115
    %v118 = vmin.f32 16.0, %v117
    %v119 = vmul.f32 %v118, 2.1237322e-06
    %v120 = vadd.f32 %v119, 0.00028619796
    %v121 = vmul.f32 %v118, %v120
    %v122 = vadd.f32 %v121, 0.0036580483
    %v123 = vmul.f32 %v118, %v122
    %v124 = vadd.f32 %v123, 0.05243302
    %v125 = vmul.f32 %v118, %v124
    %v126 = vadd.f32 %v125, 0.18741608
    %v127 = vmul.f32 %v118, %v126
    %v128 = vadd.f32 %v127, 1.1283791
    %v129 = vmul.f32 %v115, %v128
    %v130 = vmul.f32 %v118, 3.8918573e-05
    %v131 = vadd.f32 %v130, 0.001143296
    %v132 = vmul.f32 %v118, %v131
    %v133 = vadd.f32 %v132, 0.014752088
    %v134 = vmul.f32 %v118, %v133
    %v135 = vadd.f32 %v134, 0.112945676
    %v136 = vmul.f32 %v118, %v135
    %v137 = vadd.f32 %v136, 0.4994258
    %v138 = vmul.f32 %v118, %v137
    %v139 = vadd.f32 %v138, 1.0
    %v140 = vrcp.pop %v139
    %v141 = vmul.f32 %v139, %v140
    %v142 = vsub.f32 1.0, %v141
    %v143 = vmul.f32 %v140, %v142
    %v144 = vadd.f32 %v140, %v143
    %vm145 = vweird.f32 %v139
    %vm146 = vweird.f32 %v140
    %vm147 = vmor %vm145, %vm146
    %v148 = vsel %vm147, %v140, %v144
    %v149 = vand.u32 2147483647, %v139
    %vm150 = vcmp.eq.f32.partialorder %v149, 8.507059e+37
    %v151 = vand.u32 %v139, 2147483648
    %v152 = vor.u32 1.1754944e-38, %v151
    %v153 = vsel %vm150, %v152, %v148
    %v154 = vmul.f32 %v129, %v153
    %v155 = vmin.f32 %v154, 1.0
    %v156 = vmax.f32 %v155, -1.0
    %v157 = vmul.f32 %v116, %v116
    %v158 = vmin.f32 16.0, %v157
    %v159 = vmul.f32 %v158, 2.1237322e-06
    %v160 = vadd.f32 %v159, 0.00028619796
    %v161 = vmul.f32 %v158, %v160
    %v162 = vadd.f32 %v161, 0.0036580483
    %v163 = vmul.f32 %v158, %v162
    %v164 = vadd.f32 %v163, 0.05243302
    %v165 = vmul.f32 %v158, %v164
    %v166 = vadd.f32 %v165, 0.18741608
    %v167 = vmul.f32 %v158, %v166
    %v168 = vadd.f32 %v167, 1.1283791
    %v169 = vmul.f32 %v116, %v168
    %v170 = vmul.f32 %v158, 3.8918573e-05
    %v171 = vadd.f32 %v170, 0.001143296
    %v172 = vmul.f32 %v158, %v171
    %v173 = vadd.f32 %v172, 0.014752088
    %v174 = vmul.f32 %v158, %v173
    %v175 = vadd.f32 %v174, 0.112945676
    %v176 = vmul.f32 %v158, %v175
    %v177 = vadd.f32 %v176, 0.4994258
    %v178 = vmul.f32 %v158, %v177
    %v179 = vadd.f32 %v178, 1.0
    %v180 = vrcp.pop %v179
    %v181 = vmul.f32 %v179, %v180
    %v182 = vsub.f32 1.0, %v181
    %v183 = vmul.f32 %v180, %v182
    %v184 = vadd.f32 %v180, %v183
    %vm185 = vweird.f32 %v179
    %vm186 = vweird.f32 %v180
    %vm187 = vmor %vm185, %vm186
    %v188 = vsel %vm187, %v180, %v184
    %v189 = vand.u32 2147483647, %v179
    %vm190 = vcmp.eq.f32.partialorder %v189, 8.507059e+37
    %v191 = vand.u32 %v179, 2147483648
    %v192 = vor.u32 1.1754944e-38, %v191
    %v193 = vsel %vm190, %v192, %v188
    %v194 = vmul.f32 %v169, %v193
    %v195 = vmin.f32 %v194, 1.0
    %v196 = vmax.f32 %v195, -1.0
    %v197 = vadd.f32 %v156, 1.0
    %v198 = vadd.f32 %v196, 1.0
    %v199 = vmul.f32 %v113, %v197
    %v200 = vmul.f32 %v114, %v198
    %v201 = vld [vmem:[#allocation8] sm:$0xff]
    %v202 = vld [vmem:[#allocation8 + $0x8] sm:$0xff]
    %v203 = vld [vmem:[#allocation8 + $0x10] sm:$0xff]
    %v204 = vld [vmem:[#allocation8 + $0x18] sm:$0xff]
    %v205 = vld [vmem:[#allocation8 + $0x20] sm:$0xff]
    %v206 = vld [vmem:[#allocation8 + $0x28] sm:$0xff]
    %v207 = vld [vmem:[#allocation8 + $0x30] sm:$0xff]
    %v208 = vld [vmem:[#allocation8 + $0x38] sm:$0xff]
    %v209 = vld [vmem:[#allocation8 + $0x40] sm:$0xff]
    %v210 = vld [vmem:[#allocation8 + $0x48] sm:$0xff]
    %v211 = vld [vmem:[#allocation8 + $0x50] sm:$0xff]
    %v212 = vld [vmem:[#allocation8 + $0x58] sm:$0xff]
    %v213 = vld [vmem:[#allocation8 + $0x60] sm:$0xff]
    %v214 = vld [vmem:[#allocation8 + $0x68] sm:$0xff]
    %v215 = vld [vmem:[#allocation8 + $0x70] sm:$0xff]
    %v216 = vld [vmem:[#allocation8 + $0x78] sm:$0xff]
    %217 = vmatpush.msra.mxu0 %v216
    %218 = vmatpush.msra.mxu0 %v215
    %219 = vmatpush.msra.mxu0 %v214
    %220 = vmatpush.msra.mxu0 %v213
    %221 = vmatpush.msra.mxu0 %v212
    %222 = vmatpush.msra.mxu0 %v211
    %223 = vmatpush.msra.mxu0 %v210
    %224 = vmatpush.msra.mxu0 %v209
    %225 = vmatpush.msra.mxu0 %v208
    %226 = vmatpush.msra.mxu0 %v207
    %227 = vmatpush.msra.mxu0 %v206
    %228 = vmatpush.msra.mxu0 %v205
    %229 = vmatpush.msra.mxu0 %v204
    %230 = vmatpush.msra.mxu0 %v203
    %231 = vmatpush.msra.mxu0 %v202
    %232 = vmatpush.msra.mxu0 %v201
    %233 = vmatmul.f32.gmra.mxu0 %v199
    %v234 = vpop.f32.mrf.mxu0
    %v235 = vadd.f32 0.0, %v234
    %236 = vmatmul.f32.gmra.mxu0 %v200
    %v237 = vpop.f32.mrf.mxu0
    %v238 = vadd.f32 0.0, %v237
    %239 = vdwg.mxu0
    %p240 = scmp.eq.s32.totalorder 0, 0
    // Predicated region
    $region34: #{tpu_custom_call.1} parent=1 // pred_check
      %p241 = pneg %p240
    $region35: #{tpu_custom_call.1} parent=1 // pred_check_branch
      %243 = sbr.rel (%p241) target = $region37
    $region36: #{tpu_custom_call.1} parent=1 // pred_region
      %244 = vst [vmem:[#allocation2] sm:$0xff] %v235
      %245 = vst [vmem:[#allocation2 + $0x8] sm:$0xff] %v238
    $region37: #{tpu_custom_call.1} parent=1 // pred_fallthru
      _
    %p246 = scmp.ne.s32.totalorder 0, 0
    // Predicated region
    $region38: #{tpu_custom_call.1} parent=1 // pred_check
      %p247 = pneg %p246
    $region39: #{tpu_custom_call.1} parent=1 // pred_check_branch
      %249 = sbr.rel (%p247) target = $region41
    $region40: #{tpu_custom_call.1} parent=1 // pred_region
      %v250 = vld [vmem:[#allocation2] sm:$0xff]
      %v251 = vld [vmem:[#allocation2 + $0x8] sm:$0xff]
      %v252 = vadd.f32 %v250, %v235
      %v253 = vadd.f32 %v251, %v238
      %254 = vst [vmem:[#allocation2] sm:$0xff] %v252
      %255 = vst [vmem:[#allocation2 + $0x8] sm:$0xff] %v253
    $region41: #{tpu_custom_call.1} parent=1 // pred_fallthru
      _
    // Predicated region
    $region42: #{tpu_custom_call.1} parent=1 // pred_check
      %p256 = pneg %p240
    $region43: #{tpu_custom_call.1} parent=1 // pred_check_branch
      %258 = sbr.rel (%p256) target = $region45
    $region44: #{tpu_custom_call.1} parent=1 // pred_region
      %v259 = vld [vmem:[#allocation2] sm:$0xff]
      %v260 = vld [vmem:[#allocation2 + $0x8] sm:$0xff]
      %v261 = vld [vmem:[%s4] sm:$0x1]
      %v263 = vperm.slane %v261, 0
      %v265 = vadd.f32 %v259, %v263
      %v266 = vadd.f32 %v260, %v263
      %267 = vst [vmem:[#allocation9] sm:$0xff] %v265
      %268 = vst [vmem:[#allocation9 + $0x8] sm:$0xff] %v266
    $region45: #{tpu_custom_call.1} parent=1 // pred_fallthru
      _
    // Predicated region
    $region46: #{tpu_custom_call.1} parent=1 // pred_check
      _
    $region47: #{tpu_custom_call.1} parent=1 // pred_check_branch
      %270 = sbr.rel (0) target = $region49
    $region48: #{tpu_custom_call.1} parent=1 // pred_region
      %272 = vsyncadd [#allocation5], 0
      %s273 = sshll.u32 [#allocation9], 4
      %s274 = int_to_ptr.vmem [resolvable:$true] %s273
      %s275 = sshll.u32 %s5, 4
      %s276 = int_to_ptr.hbm [resolvable:$true] %s275
      %281 = dma.vmem_to_hbm [thread:$0]  %s274, 256, %s276, [#allocation5], 128, 128, 8
    $region49: #{tpu_custom_call.1} parent=1 // pred_fallthru
      _
    // Predicated region
    $region50: #{tpu_custom_call.1} parent=1 // pred_check
      _
    $region51: #{tpu_custom_call.1} parent=1 // pred_check_branch
      %283 = sbr.rel (0) target = $region53
    $region52: #{tpu_custom_call.1} parent=1 // pred_region
      %285 = dma.done [#allocation5], 256
    $region53: #{tpu_custom_call.1} parent=1 // pred_fallthru
      _
    %286 = vsyncpa [#allocation4], 1
    %287 = vsyncpa [#allocation7], 1
    %288 = vsyncpa [#allocation5], 1

</llo_original>
